<compile_context>
chip_gen: v5e
topology: v5e:2x2
jax: 0.10.0
libtpu: 0.0.40
codegen_flags: <defaults>
</compile_context>

<pallas_src>
import jax
import jax.numpy as jnp
from jax.experimental import pallas as pl
from jax.experimental.pallas import tpu as pltpu


# ----------------------------------------------------------------------------- kernel
def _residual_broadcast_kernel(x_ref, r_ref, o_ref):
    # x_ref: (tR, tHW)  rows = flattened (batch, channel), lanes = pixels
    # r_ref: (tR, 1)    per-(batch, channel) additive term
    # o_ref: (tR, tHW)
    # Pure VPU work (rank-1 broadcast + residual add); lane-dense stores.
    o_ref[...] = x_ref[...] + r_ref[...]


# ----------------------------------------------------------------------------- helpers
def _vmem_capacity_bytes():
    """Physical VMEM per TensorCore, generation-aware fallback."""
    try:
        return int(pltpu.get_tpu_info().vmem_capacity_bytes)
    except Exception:
        pass
    try:
        kind = jax.devices()[0].device_kind.lower()
    except Exception:
        kind = ""
    if "v7" in kind or "7x" in kind:
        return 64 * 1024 * 1024          # v7x: 64 MiB per TC
    return 128 * 1024 * 1024             # v5e / v6e: 128 MiB


def _pick_tiles(rows, hw, vmem_bytes):
    """Pick (row_tile, lane_tile) for f32 streaming add with 2-in + 2-out buffers.

    Budget ~ VMEM/4 for the four double-buffered blocks.  Row tile is a multiple
    of 8 (or the full extent when small); lane tile is a multiple of 128 (or the
    full extent when it fits) -- never a giant full-HW block for odd sizes, the
    partial edge block is handled by pl.cdiv + masked stores on that tile only.
    """
    budget = vmem_bytes // 4
    max_block_elems = max(8 * 128, budget // (4 * 4))   # 4 buffers, 4 B/elem

    t_r = rows if rows <= 1024 else 1024                 # full extent or mult. of 8

    max_lanes = max(128, max_block_elems // max(t_r, 1))
    if hw <= max_lanes:
        t_hw = hw                                        # full extent (always legal)
    else:
        t_hw = max(128, (max_lanes // 128) * 128)        # 128-multiple tile
    return t_r, t_hw


# ----------------------------------------------------------------------------- wrapper
def _cross_attention_block_impl(x_nchw, emb, params):
    """x_nchw: (B, C, H, W) float32, emb: (B, E) float32."""
    B, C, H, W = x_nchw.shape
    HW = H * W
    rows = B * C

    # Hoisted per-batch algebra (f32-exact to match the PyTorch fp32 path):
    #   v = value(emb);  r = Wp @ v + bp   (the per-pixel 1x1 proj of a constant).
    hi = jax.lax.Precision.HIGHEST
    v = jnp.dot(emb, params["wv"].T, precision=hi) + params["bv"]   # (B, C)
    r = jnp.dot(v, params["wp"].T, precision=hi) + params["bp"]     # (B, C)

    x_r = x_nchw.reshape(rows, HW)                      # free reshape, no transpose
    r2 = r.reshape(rows, 1).astype(x_nchw.dtype)        # sublane-dense column

    vmem = _vmem_capacity_bytes()
    t_r, t_hw = _pick_tiles(rows, HW, vmem)
    grid = (pl.cdiv(rows, t_r), pl.cdiv(HW, t_hw))

    block_bytes = t_r * t_hw * 4
    vmem_limit = 4 * block_bytes + 4 * t_r * 4 + (8 << 20)          # blocks + slack
    vmem_limit = int(min(max(vmem_limit, 32 << 20), vmem * 3 // 4))

    out = pl.pallas_call(
        _residual_broadcast_kernel,
        out_shape=jax.ShapeDtypeStruct((rows, HW), x_nchw.dtype),
        grid_spec=pltpu.PrefetchScalarGridSpec(
            num_scalar_prefetch=0,
            grid=grid,
            in_specs=[
                pl.BlockSpec((t_r, t_hw), lambda i, j: (i, j)),     # x tile
                pl.BlockSpec((t_r, 1), lambda i, j: (i, 0)),        # r column
            ],
            out_specs=pl.BlockSpec((t_r, t_hw), lambda i, j: (i, j)),
        ),
        compiler_params=pltpu.CompilerParams(
            dimension_semantics=("parallel", "parallel"),
            vmem_limit_bytes=vmem_limit,
        ),
        input_output_aliases={0: 0},   # out = x + r, written in place (x is donated)
    )(x_r, r2)

    return out.reshape(B, C, H, W)


# Donate x so input_output_aliases is effective (no hidden defensive copy of x).
# NOTE: the caller's x buffer is consumed by this call.
cross_attention_block = jax.jit(_cross_attention_block_impl, donate_argnums=(0,))


# ----------------------------------------------------------------------------- reference
def _reference(x_nchw, emb, params):
    """Pure-JAX op-by-op mirror of the PyTorch forward pass (for verification)."""
    B, C, H, W = x_nchw.shape
    scale = float(C) ** (-0.5)
    q = jnp.einsum("bchw,oc->bohw", x_nchw, params["wq"]) + params["bq"][None, :, None, None]
    q = q.reshape(B, C, H * W).transpose(0, 2, 1)                         # (B, HW, C)
    k = emb @ params["wk"].T + params["bk"]                               # (B, C)
    v = emb @ params["wv"].T + params["bv"]                               # (B, C)
    attn = jnp.einsum("bnc,bc->bn", q, k)[..., None] * scale              # (B, HW, 1)
    attn = jax.nn.softmax(attn, axis=-1)                                  # == ones
    out = attn * v[:, None, :]                                            # (B, HW, C)
    out = out.transpose(0, 2, 1).reshape(B, C, H, W)
    out = jnp.einsum("bchw,oc->bohw", out, params["wp"]) + params["bp"][None, :, None, None]
    return x_nchw + out


if __name__ == "__main__":
    B, C, H, W = 2, 4, 16, 16
    E = 8  # emb_dim

    key = jax.random.PRNGKey(0)
    ks = jax.random.split(key, 10)

    params = {
        "wq": jax.random.normal(ks[0], (C, C), jnp.float32) * 0.1,   # Conv2d 1x1 weight (Cout, Cin)
        "bq": jax.random.normal(ks[1], (C,), jnp.float32) * 0.1,
        "wk": jax.random.normal(ks[2], (C, E), jnp.float32) * 0.1,   # Linear weight (Cout, E)
        "bk": jax.random.normal(ks[3], (C,), jnp.float32) * 0.1,
        "wv": jax.random.normal(ks[4], (C, E), jnp.float32) * 0.1,
        "bv": jax.random.normal(ks[5], (C,), jnp.float32) * 0.1,
        "wp": jax.random.normal(ks[6], (C, C), jnp.float32) * 0.1,
        "bp": jax.random.normal(ks[7], (C,), jnp.float32) * 0.1,
    }
    x = jax.random.normal(ks[8], (B, C, H, W), jnp.float32)
    emb = jax.random.normal(ks[9], (B, E), jnp.float32)

    # Compute the reference BEFORE the kernel call: x is donated to the kernel.
    ref = _reference(x, emb, params)
    ref = jax.block_until_ready(ref)

    out = cross_attention_block(x, emb, params)
    out = jax.block_until_ready(out)

    assert out.shape == (B, C, H, W)
    assert jnp.max(jnp.abs(out - ref)) < 1e-4, "mismatch vs. pure-JAX reference"

    print("KERNEL_OK")
</pallas_src>

<mosaic_0001>
module attributes {stable_mosaic.version = 11 : i64} {
  func.func @_residual_broadcast_kernel(%arg0: i32, %arg1: i32, %arg2: memref<8x256xf32, #tpu.memory_space<vmem>>, %arg3: memref<8x1xf32, #tpu.memory_space<vmem>>, %arg4: memref<8x256xf32, #tpu.memory_space<vmem>>) attributes {dimension_semantics = [#tpu.dimension_semantics<parallel>, #tpu.dimension_semantics<parallel>], iteration_bounds = array<i64: 1, 1>, scalar_prefetch = 0 : i64, scratch_operands = 0 : i64, tpu.core_type = #tpu.core_type<tc>, window_params = [{transform_indices = @transform_0, window_bounds = array<i64: 8, 256>}, {transform_indices = @transform_1, window_bounds = array<i64: 8, 1>}, {transform_indices = @transform_2, window_bounds = array<i64: 8, 256>}]} {
    %c0 = arith.constant 0 : index
    %c0_0 = arith.constant 0 : index
    %0 = vector.load %arg2[%c0, %c0_0] : memref<8x256xf32, #tpu.memory_space<vmem>>, vector<8x256xf32>
    %c0_1 = arith.constant 0 : index
    %c0_2 = arith.constant 0 : index
    %1 = vector.load %arg3[%c0_1, %c0_2] : memref<8x1xf32, #tpu.memory_space<vmem>>, vector<8x1xf32>
    %2 = vector.broadcast %1 : vector<8x1xf32> to vector<8x256xf32>
    %3 = arith.addf %0, %2 : vector<8x256xf32>
    %c0_3 = arith.constant 0 : index
    %c0_4 = arith.constant 0 : index
    %4 = vector.load %arg4[%c0_3, %c0_4] : memref<8x256xf32, #tpu.memory_space<vmem>>, vector<8x256xf32>
    tpu.vector_store %arg4[%c0_3, %c0_4], %3 {strides = array<i32>} : memref<8x256xf32, #tpu.memory_space<vmem>>, vector<8x256xf32>,
    return
  }
  func.func @transform_0(%arg0: i32, %arg1: i32) -> (i32, i32) {
    %c0_i32 = arith.constant 0 : i32
    return %arg0, %arg1 : i32, i32
  }
  func.func @transform_1(%arg0: i32, %arg1: i32) -> (i32, i32) {
    %c0_i32 = arith.constant 0 : i32
    %c0_i32_0 = arith.constant 0 : i32
    return %arg0, %c0_i32 : i32, i32
  }
  func.func @transform_2(%arg0: i32, %arg1: i32) -> (i32, i32) {
    %c0_i32 = arith.constant 0 : i32
    return %arg0, %arg1 : i32, i32
  }
}

</mosaic_0001>

<llo_original>
// kernel: _cross_attention_block_impl.1
$region0: #{_cross_attention_block_impl.1}
  #allocation0 [shape = 'u32[]', space=smem, size = 0x4, offset = 0x4, fixed_abs, tag = 'smem constant byte address 0x4 - core index']
  #allocation1 [shape = 'u32[72,128]{1,0:T(1,128)}', space=vmem, size = 0x9000, scoped, tag = 'internal scratch']
  %s0 = inlined_call_operand.vmem [shape: f32[8,256], index: 0, kind: input, shape index: {}, may-alias: {0,2}]
  %s1 = inlined_call_operand.vmem [shape: f32[8,1], index: 1, kind: input, shape index: {}]
  %s2 = inlined_call_operand.vmem [shape: f32[8,256], index: 2, kind: output, shape index: {}, may-alias: {0,2}]
  %s3 = sld [smem:[#allocation0]]
  $region18: #{_cross_attention_block_impl.1} parent=0
    _
  %s5 = ssub.s32 1, %s3
  %s6 = scalar_select 0, %s5, %s3
  // Predicated region
  $region2: #{_cross_attention_block_impl.1} parent=0 // pred_check
    _
  $region3: #{_cross_attention_block_impl.1} parent=0 // pred_check_branch
    %8 = sbr.rel (0) target = $region5
  $region4: #{_cross_attention_block_impl.1} parent=0 // pred_region
    _
  $region5: #{_cross_attention_block_impl.1} parent=0 // pred_fallthru
    _
  // Predicated region
  $region6: #{_cross_attention_block_impl.1} parent=0 // pred_check
    _
  $region7: #{_cross_attention_block_impl.1} parent=0 // pred_check_branch
    %10 = sbr.rel (0) target = $region9
  $region8: #{_cross_attention_block_impl.1} parent=0 // pred_region
    _
  $region9: #{_cross_attention_block_impl.1} parent=0 // pred_fallthru
    _
  %v11 = vld [vmem:[%s0] sm:$0xff]
  %v12 = vld [vmem:[%s0 + $0x8] sm:$0xff]
  %v13 = vld [vmem:[%s1] sm:$0xff]
  %15 = vset.pattern.permute.xlu0 0
  %16 = vperm.xlu0 %15, %v13
  %v17 = vpop.permute.xlu0 %16
  %v19 = vadd.f32 %v11, %v17
  %v20 = vadd.f32 %v12, %v17
  %21 = vst [vmem:[%s2] sm:$0xff] %v19
  %22 = vst [vmem:[%s2 + $0x8] sm:$0xff] %v20
  // Predicated region
  $region10: #{_cross_attention_block_impl.1} parent=0 // pred_check
    _
  $region11: #{_cross_attention_block_impl.1} parent=0 // pred_check_branch
    %24 = sbr.rel (0) target = $region13
  $region12: #{_cross_attention_block_impl.1} parent=0 // pred_region
    _
  $region13: #{_cross_attention_block_impl.1} parent=0 // pred_fallthru
    _
  // Predicated region
  $region14: #{_cross_attention_block_impl.1} parent=0 // pred_check
    _
  $region15: #{_cross_attention_block_impl.1} parent=0 // pred_check_branch
    %26 = sbr.rel (0) target = $region17
  $region16: #{_cross_attention_block_impl.1} parent=0 // pred_region
    _
  $region17: #{_cross_attention_block_impl.1} parent=0 // pred_fallthru
    _

</llo_original>
